<compile_context>
chip_gen: v5e
topology: v5e:2x2
jax: 0.10.0
libtpu: 0.0.40
codegen_flags: <defaults>
</compile_context>

<pallas_src>
import jax
import jax.numpy as jnp
from jax.experimental import pallas as pl
from jax.experimental.pallas import tpu as pltpu


# ----------------------------------------------------------------------------
# Static model dims (toy shapes consistent with the module: in_chans=13)
# ----------------------------------------------------------------------------
B = 2
IN_CHANS = 13
C = 2 * IN_CHANS          # images arrive with 26 channels, reshaped to 2 imgs
H = W = 16
HW = H * W
N_IMG = 2 * B
M_ROWS = N_IMG * HW       # rows in the flattened backbone matmul

CK = IN_CHANS * 9         # 117 im2col columns
CK_PAD = 128
F = 32                    # stand-in for backbone.num_features
F_PAD = 128
MLP_IN = 18
MLP_IN_PAD = 128
MLP_OUT = 64
OUT_PAD = 128             # fc output padded to a lane-dense slab
LN_EPS = 1e-5


# ----------------------------------------------------------------------------
# Fused per-sample kernel (grid over batch)
# ----------------------------------------------------------------------------
def fused_kernel(patch_ref, feat_ref, convw_ref, w1_ref, b1_ref, gamma_ref,
                 beta_ref, wfc_img_ref, wfc_mlp_ref, bfc_ref, o_ref):
    # ---- backbone: one lane-dense matmul for this sample's 2 images -------
    y = jnp.dot(patch_ref[...], convw_ref[...],
                preferred_element_type=jnp.float32)          # (2*HW, F_PAD)
    y = jnp.maximum(y, 0.0)                                  # ReLU, f32 VPU

    # ---- per-image global average pool on the VPU/XLU (no MXU pool dots) --
    pooled = jnp.sum(y.reshape(2, HW, F_PAD), axis=1) * (1.0 / HW)   # (2, F_PAD) f32

    # ---- MLP head: Linear(18,64) + LayerNorm(64) + ReLU (Dropout = id) ----
    feat = feat_ref[0]                                        # (1, MLP_IN_PAD) bf16
    h = jnp.dot(feat, w1_ref[...],
                preferred_element_type=jnp.float32) + b1_ref[...]    # (1, 64)
    mu = jnp.mean(h, axis=-1, keepdims=True)
    var = jnp.mean((h - mu) ** 2, axis=-1, keepdims=True)
    hn = (h - mu) * jax.lax.rsqrt(var + LN_EPS)
    hn = hn * gamma_ref[...] + beta_ref[...]
    hn = jnp.maximum(hn, 0.0)                                 # (1, 64)

    # ---- final fc (scalar output) as VPU multiplies + reduces, f32 --------
    img_s = jnp.sum(pooled * wfc_img_ref[...], axis=0, keepdims=True)  # (1, F_PAD)
    img_s = jnp.sum(img_s, axis=-1, keepdims=True)                      # (1, 1)
    mlp_s = jnp.sum(hn * wfc_mlp_ref[...], axis=-1, keepdims=True)      # (1, 1)
    out = img_s + mlp_s + bfc_ref[...]                                  # (1, 1)
    o_ref[...] = jnp.broadcast_to(out.reshape(1, 1, 1), (1, 1, OUT_PAD))


# ----------------------------------------------------------------------------
# Glue: im2col (bf16), one-time weight prep, jitted per-call wrapper
# ----------------------------------------------------------------------------
def im2col_3x3_same(x):
    """x: (N, C, H, W) -> patches (N, H*W, C*9), SAME padding, stride 1."""
    n, c, h, w = x.shape
    xp = jnp.pad(x, ((0, 0), (0, 0), (1, 1), (1, 1)))
    cols = []
    for dy in range(3):
        for dx in range(3):
            cols.append(xp[:, :, dy:dy + h, dx:dx + w])
    p = jnp.stack(cols, axis=2)                  # (N, C, 9, H, W)
    p = p.transpose(0, 3, 4, 1, 2)               # (N, H, W, C, 9)
    return p.reshape(n, h * w, c * 9)


def prepare_params(params):
    """Call-invariant preprocessing, done ONCE (hoisted out of the call path)."""
    conv_w = jnp.pad(params["conv_w"],
                     ((0, CK_PAD - CK), (0, F_PAD - F))).astype(jnp.bfloat16)
    w1 = jnp.pad(params["w1"],
                 ((0, MLP_IN_PAD - MLP_IN), (0, 0))).astype(jnp.bfloat16)
    wfc = params["wfc"][:, 0]
    wfc_img = jnp.zeros((2, F_PAD), jnp.float32)
    wfc_img = wfc_img.at[0, :F].set(wfc[:F]).at[1, :F].set(wfc[F:2 * F])
    wfc_mlp = wfc[2 * F:].reshape(1, MLP_OUT).astype(jnp.float32)
    return {
        "conv_w": conv_w,
        "w1": w1,
        "b1": params["b1"].astype(jnp.float32),
        "gamma": params["gamma"].astype(jnp.float32),
        "beta": params["beta"].astype(jnp.float32),
        "wfc_img": wfc_img,
        "wfc_mlp": wfc_mlp,
        "bfc": params["bfc"].astype(jnp.float32),
    }


@jax.jit
def model_forward(images, features, prep):
    b, c, h, w = images.shape
    assert (h * w, c) == (HW, C)
    n_img = 2 * b

    # im2col in bf16 (halves the HBM patch slab vs f32); zero-pad K to 128.
    x = images.reshape(n_img, c // 2, h, w).astype(jnp.bfloat16)
    patches = im2col_3x3_same(x).reshape(n_img * h * w, -1)          # (M, CK)
    patches_p = jnp.pad(patches, ((0, 0), (0, CK_PAD - patches.shape[1])))

    feat_p = jnp.pad(features.astype(jnp.bfloat16),
                     ((0, 0), (0, MLP_IN_PAD - features.shape[1])))
    feat_p = feat_p.reshape(b, 1, MLP_IN_PAD)

    out = pl.pallas_call(
        fused_kernel,
        out_shape=jax.ShapeDtypeStruct((b, 1, OUT_PAD), jnp.float32),
        grid=(b,),
        in_specs=[
            pl.BlockSpec((2 * HW, CK_PAD), lambda i: (i, 0)),        # patches
            pl.BlockSpec((1, 1, MLP_IN_PAD), lambda i: (i, 0, 0)),   # features
            pl.BlockSpec((CK_PAD, F_PAD), lambda i: (0, 0)),         # conv_w
            pl.BlockSpec((MLP_IN_PAD, MLP_OUT), lambda i: (0, 0)),   # w1
            pl.BlockSpec((1, MLP_OUT), lambda i: (0, 0)),            # b1
            pl.BlockSpec((1, MLP_OUT), lambda i: (0, 0)),            # gamma
            pl.BlockSpec((1, MLP_OUT), lambda i: (0, 0)),            # beta
            pl.BlockSpec((2, F_PAD), lambda i: (0, 0)),              # wfc_img
            pl.BlockSpec((1, MLP_OUT), lambda i: (0, 0)),            # wfc_mlp
            pl.BlockSpec((1, 1), lambda i: (0, 0)),                  # bfc
        ],
        out_specs=pl.BlockSpec((1, 1, OUT_PAD), lambda i: (i, 0, 0)),
        compiler_params=pltpu.CompilerParams(
            dimension_semantics=("parallel",)),
    )(patches_p, feat_p, prep["conv_w"], prep["w1"], prep["b1"],
      prep["gamma"], prep["beta"], prep["wfc_img"], prep["wfc_mlp"],
      prep["bfc"])
    return out[:, 0, :1]                                              # (B, 1)


# ----------------------------------------------------------------------------
# Pure-JAX reference (mirrors the kernel's bf16 rounding points)
# ----------------------------------------------------------------------------
def reference_forward(images, features, params):
    f32 = jnp.float32
    b, c, h, w = images.shape
    x = images.reshape(b * 2, c // 2, h, w).astype(jnp.bfloat16)
    patches = im2col_3x3_same(x).astype(f32)                         # (N, HW, CK)
    w_conv = params["conv_w"].astype(jnp.bfloat16).astype(f32)
    y = jnp.maximum(jnp.einsum("npc,cf->npf", patches, w_conv), 0.0)
    img_feat = y.mean(axis=1).reshape(b, -1)                         # (B, 2F) f32

    f_bf = features.astype(jnp.bfloat16).astype(f32)
    w1_bf = params["w1"].astype(jnp.bfloat16).astype(f32)
    h1 = f_bf @ w1_bf + params["b1"]
    mu = h1.mean(-1, keepdims=True)
    var = ((h1 - mu) ** 2).mean(-1, keepdims=True)
    h1 = (h1 - mu) * jax.lax.rsqrt(var + LN_EPS)
    h1 = h1 * params["gamma"] + params["beta"]
    h1 = jnp.maximum(h1, 0.0)

    cat = jnp.concatenate([img_feat, h1], axis=1)                    # f32
    return cat @ params["wfc"] + params["bfc"]


# ----------------------------------------------------------------------------
if __name__ == "__main__":
    key = jax.random.PRNGKey(0)
    ks = jax.random.split(key, 8)

    images = jax.random.normal(ks[0], (B, C, H, W), jnp.float32)
    features = jax.random.normal(ks[1], (B, MLP_IN), jnp.float32)

    params = {
        # conv weight (F, Cin, 3, 3) flattened to (Cin*9, F) for im2col matmul
        "conv_w": (jax.random.normal(ks[2], (F, IN_CHANS, 3, 3), jnp.float32)
                   * 0.05).reshape(F, IN_CHANS * 9).T,
        "w1": jax.random.normal(ks[3], (MLP_IN, MLP_OUT), jnp.float32) * 0.1,
        "b1": jax.random.normal(ks[4], (1, MLP_OUT), jnp.float32) * 0.01,
        "gamma": jnp.ones((1, MLP_OUT), jnp.float32),
        "beta": jnp.zeros((1, MLP_OUT), jnp.float32),
        "wfc": jax.random.normal(ks[5], (2 * F + MLP_OUT, 1), jnp.float32) * 0.05,
        "bfc": jax.random.normal(ks[6], (1, 1), jnp.float32) * 0.01,
    }

    prep = prepare_params(params)     # one-time, hoisted out of the call path

    out = jax.block_until_ready(model_forward(images, features, prep))
    ref = jax.block_until_ready(reference_forward(images, features, params))

    assert out.shape == (B, 1), out.shape
    assert jnp.allclose(out, ref, rtol=1e-3, atol=1e-3), (out, ref)
    print("KERNEL_OK")
</pallas_src>

<mosaic_0001>
module attributes {stable_mosaic.version = 11 : i64} {
  func.func @fused_kernel(%arg0: i32, %arg1: memref<512x128xbf16, #tpu.memory_space<vmem>>, %arg2: memref<1x1x128xbf16, #tpu.memory_space<vmem>>, %arg3: memref<128x128xbf16, #tpu.memory_space<vmem>>, %arg4: memref<128x64xbf16, #tpu.memory_space<vmem>>, %arg5: memref<1x64xf32, #tpu.memory_space<vmem>>, %arg6: memref<1x64xf32, #tpu.memory_space<vmem>>, %arg7: memref<1x64xf32, #tpu.memory_space<vmem>>, %arg8: memref<2x128xf32, #tpu.memory_space<vmem>>, %arg9: memref<1x64xf32, #tpu.memory_space<vmem>>, %arg10: memref<1x1xf32, #tpu.memory_space<vmem>>, %arg11: memref<1x1x128xf32, #tpu.memory_space<vmem>>) attributes {dimension_semantics = [#tpu.dimension_semantics<parallel>], iteration_bounds = array<i64: 2>, scalar_prefetch = 0 : i64, scratch_operands = 0 : i64, tpu.core_type = #tpu.core_type<tc>, window_params = [{transform_indices = @transform_0, window_bounds = array<i64: 512, 128>}, {transform_indices = @transform_1, window_bounds = array<i64: 1, 1, 128>}, {pipeline_mode = #tpu.pipeline_mode<synchronous>, transform_indices = @transform_2, window_bounds = array<i64: 128, 128>}, {pipeline_mode = #tpu.pipeline_mode<synchronous>, transform_indices = @transform_3, window_bounds = array<i64: 128, 64>}, {pipeline_mode = #tpu.pipeline_mode<synchronous>, transform_indices = @transform_4, window_bounds = array<i64: 1, 64>}, {pipeline_mode = #tpu.pipeline_mode<synchronous>, transform_indices = @transform_5, window_bounds = array<i64: 1, 64>}, {pipeline_mode = #tpu.pipeline_mode<synchronous>, transform_indices = @transform_6, window_bounds = array<i64: 1, 64>}, {pipeline_mode = #tpu.pipeline_mode<synchronous>, transform_indices = @transform_7, window_bounds = array<i64: 2, 128>}, {pipeline_mode = #tpu.pipeline_mode<synchronous>, transform_indices = @transform_8, window_bounds = array<i64: 1, 64>}, {pipeline_mode = #tpu.pipeline_mode<synchronous>, transform_indices = @transform_9, window_bounds = array<i64: 1, 1>}, {transform_indices = @transform_10, window_bounds = array<i64: 1, 1, 128>}]} {
    %c0 = arith.constant 0 : index
    %c0_0 = arith.constant 0 : index
    %0 = vector.load %arg1[%c0, %c0_0] : memref<512x128xbf16, #tpu.memory_space<vmem>>, vector<512x128xbf16>
    %c0_1 = arith.constant 0 : index
    %c0_2 = arith.constant 0 : index
    %1 = vector.load %arg3[%c0_1, %c0_2] : memref<128x128xbf16, #tpu.memory_space<vmem>>, vector<128x128xbf16>
    %cst = arith.constant dense<0.000000e+00> : vector<512x128xf32>
    %2 = tpu.matmul %0, %1, %cst {dimension_numbers = #tpu.dot_dimension_numbers<[1], [0], [0], [1], [0, 0, 1, 1], [], []>} : vector<512x128xbf16>, vector<128x128xbf16>, vector<512x128xf32> -> vector<512x128xf32>
    %cst_3 = arith.constant 0.000000e+00 : f32
    %3 = vector.broadcast %cst_3 : f32 to vector<512x128xf32>
    %4 = arith.maximumf %2, %3 : vector<512x128xf32>
    %5 = vector.shape_cast %4 : vector<512x128xf32> to vector<2x256x128xf32>
    %cst_4 = arith.constant dense<0.000000e+00> : vector<2x128xf32>
    %6 = vector.multi_reduction <add>, %5, %cst_4 [1] : vector<2x256x128xf32> to vector<2x128xf32>
    %cst_5 = arith.constant 3.906250e-03 : f32
    %7 = vector.broadcast %cst_5 : f32 to vector<2x128xf32>
    %8 = arith.mulf %6, %7 : vector<2x128xf32>
    %c0_6 = arith.constant 0 : index
    %c0_7 = arith.constant 0 : index
    %c0_8 = arith.constant 0 : index
    %9 = vector.load %arg2[%c0_6, %c0_7, %c0_8] : memref<1x1x128xbf16, #tpu.memory_space<vmem>>, vector<1x1x128xbf16>
    %10 = vector.shape_cast %9 : vector<1x1x128xbf16> to vector<1x128xbf16>
    %c0_9 = arith.constant 0 : index
    %c0_10 = arith.constant 0 : index
    %11 = vector.load %arg4[%c0_9, %c0_10] : memref<128x64xbf16, #tpu.memory_space<vmem>>, vector<128x64xbf16>
    %cst_11 = arith.constant dense<0.000000e+00> : vector<1x64xf32>
    %12 = tpu.matmul %10, %11, %cst_11 {dimension_numbers = #tpu.dot_dimension_numbers<[1], [0], [0], [1], [0, 0, 1, 1], [], []>} : vector<1x128xbf16>, vector<128x64xbf16>, vector<1x64xf32> -> vector<1x64xf32>
    %c0_12 = arith.constant 0 : index
    %c0_13 = arith.constant 0 : index
    %13 = vector.load %arg5[%c0_12, %c0_13] : memref<1x64xf32, #tpu.memory_space<vmem>>, vector<1x64xf32>
    %14 = arith.addf %12, %13 : vector<1x64xf32>
    %cst_14 = arith.constant dense<0.000000e+00> : vector<1xf32>
    %15 = vector.multi_reduction <add>, %14, %cst_14 [1] : vector<1x64xf32> to vector<1xf32>
    %16 = vector.shape_cast %15 : vector<1xf32> to vector<1x1xf32>
    %cst_15 = arith.constant 6.400000e+01 : f32
    %17 = vector.broadcast %cst_15 : f32 to vector<1x1xf32>
    %18 = arith.divf %16, %17 : vector<1x1xf32>
    %19 = vector.broadcast %18 : vector<1x1xf32> to vector<1x64xf32>
    %20 = arith.subf %14, %19 : vector<1x64xf32>
    %21 = arith.mulf %20, %20 : vector<1x64xf32>
    %cst_16 = arith.constant dense<0.000000e+00> : vector<1xf32>
    %22 = vector.multi_reduction <add>, %21, %cst_16 [1] : vector<1x64xf32> to vector<1xf32>
    %23 = vector.shape_cast %22 : vector<1xf32> to vector<1x1xf32>
    %cst_17 = arith.constant 6.400000e+01 : f32
    %24 = vector.broadcast %cst_17 : f32 to vector<1x1xf32>
    %25 = arith.divf %23, %24 : vector<1x1xf32>
    %26 = vector.broadcast %18 : vector<1x1xf32> to vector<1x64xf32>
    %27 = arith.subf %14, %26 : vector<1x64xf32>
    %cst_18 = arith.constant 9.99999974E-6 : f32
    %28 = vector.broadcast %cst_18 : f32 to vector<1x1xf32>
    %29 = arith.addf %25, %28 : vector<1x1xf32>
    %30 = math.rsqrt %29 : vector<1x1xf32>
    %31 = vector.broadcast %30 : vector<1x1xf32> to vector<1x64xf32>
    %32 = arith.mulf %27, %31 : vector<1x64xf32>
    %c0_19 = arith.constant 0 : index
    %c0_20 = arith.constant 0 : index
    %33 = vector.load %arg6[%c0_19, %c0_20] : memref<1x64xf32, #tpu.memory_space<vmem>>, vector<1x64xf32>
    %34 = arith.mulf %32, %33 : vector<1x64xf32>
    %c0_21 = arith.constant 0 : index
    %c0_22 = arith.constant 0 : index
    %35 = vector.load %arg7[%c0_21, %c0_22] : memref<1x64xf32, #tpu.memory_space<vmem>>, vector<1x64xf32>
    %36 = arith.addf %34, %35 : vector<1x64xf32>
    %cst_23 = arith.constant 0.000000e+00 : f32
    %37 = vector.broadcast %cst_23 : f32 to vector<1x64xf32>
    %38 = arith.maximumf %36, %37 : vector<1x64xf32>
    %c0_24 = arith.constant 0 : index
    %c0_25 = arith.constant 0 : index
    %39 = vector.load %arg8[%c0_24, %c0_25] : memref<2x128xf32, #tpu.memory_space<vmem>>, vector<2x128xf32>
    %40 = arith.mulf %8, %39 : vector<2x128xf32>
    %cst_26 = arith.constant dense<0.000000e+00> : vector<128xf32>
    %41 = vector.multi_reduction <add>, %40, %cst_26 [0] : vector<2x128xf32> to vector<128xf32>
    %42 = vector.shape_cast %41 : vector<128xf32> to vector<1x128xf32>
    %cst_27 = arith.constant dense<0.000000e+00> : vector<1xf32>
    %43 = vector.multi_reduction <add>, %42, %cst_27 [1] : vector<1x128xf32> to vector<1xf32>
    %44 = vector.shape_cast %43 : vector<1xf32> to vector<1x1xf32>
    %c0_28 = arith.constant 0 : index
    %c0_29 = arith.constant 0 : index
    %45 = vector.load %arg9[%c0_28, %c0_29] : memref<1x64xf32, #tpu.memory_space<vmem>>, vector<1x64xf32>
    %46 = arith.mulf %38, %45 : vector<1x64xf32>
    %cst_30 = arith.constant dense<0.000000e+00> : vector<1xf32>
    %47 = vector.multi_reduction <add>, %46, %cst_30 [1] : vector<1x64xf32> to vector<1xf32>
    %48 = vector.shape_cast %47 : vector<1xf32> to vector<1x1xf32>
    %49 = arith.addf %44, %48 : vector<1x1xf32>
    %c0_31 = arith.constant 0 : index
    %c0_32 = arith.constant 0 : index
    %50 = vector.load %arg10[%c0_31, %c0_32] : memref<1x1xf32, #tpu.memory_space<vmem>>, vector<1x1xf32>
    %51 = arith.addf %49, %50 : vector<1x1xf32>
    %52 = vector.shape_cast %51 : vector<1x1xf32> to vector<1x1x1xf32>
    %53 = vector.shape_cast %52 : vector<1x1x1xf32> to vector<1x1x1xf32>
    %54 = vector.broadcast %53 : vector<1x1x1xf32> to vector<1x1x128xf32>
    %c0_33 = arith.constant 0 : index
    %c0_34 = arith.constant 0 : index
    %c0_35 = arith.constant 0 : index
    %55 = vector.load %arg11[%c0_33, %c0_34, %c0_35] : memref<1x1x128xf32, #tpu.memory_space<vmem>>, vector<1x1x128xf32>
    tpu.vector_store %arg11[%c0_33, %c0_34, %c0_35], %54 {strides = array<i32>} : memref<1x1x128xf32, #tpu.memory_space<vmem>>, vector<1x1x128xf32>,
    return
  }
  func.func @transform_0(%arg0: i32) -> (i32, i32) {
    %c0_i32 = arith.constant 0 : i32
    %c0_i32_0 = arith.constant 0 : i32
    return %arg0, %c0_i32 : i32, i32
  }
  func.func @transform_1(%arg0: i32) -> (i32, i32, i32) {
    %c0_i32 = arith.constant 0 : i32
    %c0_i32_0 = arith.constant 0 : i32
    %c0_i32_1 = arith.constant 0 : i32
    return %arg0, %c0_i32, %c0_i32_0 : i32, i32, i32
  }
  func.func @transform_2(%arg0: i32) -> (i32, i32) {
    %c0_i32 = arith.constant 0 : i32
    %c0_i32_0 = arith.constant 0 : i32
    %c0_i32_1 = arith.constant 0 : i32
    return %c0_i32, %c0_i32_0 : i32, i32
  }
  func.func @transform_3(%arg0: i32) -> (i32, i32) {
    %c0_i32 = arith.constant 0 : i32
    %c0_i32_0 = arith.constant 0 : i32
    %c0_i32_1 = arith.constant 0 : i32
    return %c0_i32, %c0_i32_0 : i32, i32
  }
  func.func @transform_4(%arg0: i32) -> (i32, i32) {
    %c0_i32 = arith.constant 0 : i32
    %c0_i32_0 = arith.constant 0 : i32
    %c0_i32_1 = arith.constant 0 : i32
    return %c0_i32, %c0_i32_0 : i32, i32
  }
  func.func @transform_5(%arg0: i32) -> (i32, i32) {
    %c0_i32 = arith.constant 0 : i32
    %c0_i32_0 = arith.constant 0 : i32
    %c0_i32_1 = arith.constant 0 : i32
    return %c0_i32, %c0_i32_0 : i32, i32
  }
  func.func @transform_6(%arg0: i32) -> (i32, i32) {
    %c0_i32 = arith.constant 0 : i32
    %c0_i32_0 = arith.constant 0 : i32
    %c0_i32_1 = arith.constant 0 : i32
    return %c0_i32, %c0_i32_0 : i32, i32
  }
  func.func @transform_7(%arg0: i32) -> (i32, i32) {
    %c0_i32 = arith.constant 0 : i32
    %c0_i32_0 = arith.constant 0 : i32
    %c0_i32_1 = arith.constant 0 : i32
    return %c0_i32, %c0_i32_0 : i32, i32
  }
  func.func @transform_8(%arg0: i32) -> (i32, i32) {
    %c0_i32 = arith.constant 0 : i32
    %c0_i32_0 = arith.constant 0 : i32
    %c0_i32_1 = arith.constant 0 : i32
    return %c0_i32, %c0_i32_0 : i32, i32
  }
  func.func @transform_9(%arg0: i32) -> (i32, i32) {
    %c0_i32 = arith.constant 0 : i32
    %c0_i32_0 = arith.constant 0 : i32
    %c0_i32_1 = arith.constant 0 : i32
    return %c0_i32, %c0_i32_0 : i32, i32
  }
  func.func @transform_10(%arg0: i32) -> (i32, i32, i32) {
    %c0_i32 = arith.constant 0 : i32
    %c0_i32_0 = arith.constant 0 : i32
    %c0_i32_1 = arith.constant 0 : i32
    return %arg0, %c0_i32, %c0_i32_0 : i32, i32, i32
  }
}

</mosaic_0001>

<llo_original>
// kernel: model_forward.1
$region0: #{model_forward.1}
  #allocation0 [shape = 'u32[]', space=smem, size = 0x4, offset = 0x4, fixed_abs, tag = 'smem constant byte address 0x4 - core index']
  #allocation1 [shape = 'u32[72,128]{1,0:T(1,128)}', space=vmem, size = 0x9000, scoped, tag = 'internal scratch']
  #allocation2 [shape = 'f32[1,1]{1,0:T(1,128)S(1)}', space=vmem, size = 0x200, scoped, tag = 'scoped memory for model_forward.1']
  %s0 = inlined_call_operand.vmem [shape: bf16[1024,128], index: 0, kind: input, shape index: {}]
  %s1 = inlined_call_operand.vmem [shape: bf16[2,1,128], index: 1, kind: input, shape index: {}]
  %s2 = inlined_call_operand.vmem [shape: bf16[128,128], index: 2, kind: input, shape index: {}]
  %s3 = inlined_call_operand.vmem [shape: bf16[128,64], index: 3, kind: input, shape index: {}]
  %s4 = inlined_call_operand.vmem [shape: f32[1,64], index: 4, kind: input, shape index: {}]
  %s5 = inlined_call_operand.vmem [shape: f32[1,64], index: 5, kind: input, shape index: {}]
  %s6 = inlined_call_operand.vmem [shape: f32[1,64], index: 6, kind: input, shape index: {}]
  %s7 = inlined_call_operand.vmem [shape: f32[2,128], index: 7, kind: input, shape index: {}]
  %s8 = inlined_call_operand.vmem [shape: f32[1,64], index: 8, kind: input, shape index: {}]
  %s9 = inlined_call_operand.<no memory space> [shape: f32[1,1], index: 9, kind: input, shape index: {}]
  %s10 = inlined_call_operand.vmem [shape: f32[2,1,128], index: 10, kind: output, shape index: {}]
  %s11 = sld [smem:[#allocation0]]
  $region73: #{model_forward.1} parent=0
    _
  %s13 = ssub.s32 1, %s11
  %s14 = scalar_select 0, %s13, %s11
  %v15 = vstv %s9
  %16 = vst [vmem:[#allocation2] sm:$0x1] %v15
  loop: start=0, step=1, limit=4
  $region2: #{model_forward.1} parent=0 // loop_pre_header
    _
  $region3: #{model_forward.1} parent=0 // loop_header
    %s18 = sphi 0, %s22
    %p19 = scmp.ge.s32.totalorder %s18, 4
    %s28 = sphi 0, %s30
    %s31 = sphi 0, %s28
    %s32 = sphi 0, %s31
    %s48 = sphi 0, %s32
    %s54 = sphi 0, %s56
    %s57 = sphi 0, %s54
    %s58 = sphi 0, %s57
    %s74 = sphi 0, %s58
    %s78 = sphi 0, %s78
    %s80 = sphi 0, %s78
    %s81 = sphi 0, %s80
    %s95 = sphi 0, %s81
    %s99 = sphi 0, %s99
    %s101 = sphi 0, %s99
    %s102 = sphi 0, %s101
    %s116 = sphi 0, %s102
    %s120 = sphi 0, %s120
    %s122 = sphi 0, %s120
    %s123 = sphi 0, %s122
    %s137 = sphi 0, %s123
    %s141 = sphi 0, %s141
    %s143 = sphi 0, %s141
    %s144 = sphi 0, %s143
    %s158 = sphi 0, %s144
    %s162 = sphi 0, %s162
    %s164 = sphi 0, %s162
    %s165 = sphi 0, %s164
    %s179 = sphi 0, %s165
    %s183 = sphi 0, %s183
    %s185 = sphi 0, %s183
    %s186 = sphi 0, %s185
    %s200 = sphi 0, %s186
    %s204 = sphi 0, %s204
    %s206 = sphi 0, %s204
    %s207 = sphi 0, %s206
    %s221 = sphi 0, %s207
    %s225 = sphi 0, %s225
    %s227 = sphi 0, %s225
    %s228 = sphi 0, %s227
    %s242 = sphi 0, %s228
    %s248 = sphi 0, %s250
    %s251 = sphi 0, %s248
    %s252 = sphi 0, %s251
    %s268 = sphi 0, %s252
  $region4: #{model_forward.1} parent=0 // loop_header_branch
    %21 = sbr.rel (%p19) target = $region8
  $region5: #{model_forward.1} parent=0 // loop_body
    %s23 = ssub.s32 %s18, 1
    %s24 = ssub.s32 %s18, 2
    %s25 = sadd.s32 %s18, 1
    %s26 = ssub.s32 %s18, %s25
    %p27 = scmp.eq.s32.totalorder %s26, 0
    %s29 = sadd.s32 %s28, 1
    %s30 = scalar_select %p27, %s28, %s29
    %p33 = pneg %p27
    %p34 = scmp.eq.s32.totalorder %s18, 1
    %p35 = por %p33, %p34
    %p36 = scmp.ne.s32.totalorder %s28, %s31
    %p37 = scmp.eq.s32.totalorder %s18, 0
    %p38 = por %p36, %p37
    %p39 = scmp.ne.s32.totalorder %s28, %s31
    %p40 = scmp.eq.s32.totalorder %s23, 1
    %p41 = por %p39, %p40
    %p42 = scmp.ne.s32.totalorder %s31, %s32
    %p43 = scmp.eq.s32.totalorder %s23, 0
    %p44 = por %p42, %p43
    %p45 = scmp.ne.s32.totalorder %s31, %s32
    %p46 = scmp.eq.s32.totalorder %s24, 1
    %p47 = por %p45, %p46
    %p49 = scmp.ne.s32.totalorder %s32, %s48
    %p50 = scmp.eq.s32.totalorder %s24, 0
    %p51 = por %p49, %p50
    %s52 = ssub.s32 %s18, %s25
    %p53 = scmp.eq.s32.totalorder %s52, 0
    %s55 = sadd.s32 %s54, 1
    %s56 = scalar_select %p53, %s54, %s55
    %p59 = pneg %p53
    %p60 = scmp.eq.s32.totalorder %s18, 1
    %p61 = por %p59, %p60
    %p62 = scmp.ne.s32.totalorder %s54, %s57
    %p63 = scmp.eq.s32.totalorder %s18, 0
    %p64 = por %p62, %p63
    %p65 = scmp.ne.s32.totalorder %s54, %s57
    %p66 = scmp.eq.s32.totalorder %s23, 1
    %p67 = por %p65, %p66
    %p68 = scmp.ne.s32.totalorder %s57, %s58
    %p69 = scmp.eq.s32.totalorder %s23, 0
    %p70 = por %p68, %p69
    %p71 = scmp.ne.s32.totalorder %s57, %s58
    %p72 = scmp.eq.s32.totalorder %s24, 1
    %p73 = por %p71, %p72
    %p75 = scmp.ne.s32.totalorder %s58, %s74
    %p76 = scmp.eq.s32.totalorder %s24, 0
    %p77 = por %p75, %p76
    %s79 = sadd.s32 %s78, 1
    %p82 = scmp.eq.s32.totalorder %s18, 1
    %p83 = scmp.ne.s32.totalorder %s78, %s80
    %p84 = scmp.eq.s32.totalorder %s18, 0
    %p85 = por %p83, %p84
    %p86 = scmp.ne.s32.totalorder %s78, %s80
    %p87 = scmp.eq.s32.totalorder %s23, 1
    %p88 = por %p86, %p87
    %p89 = scmp.ne.s32.totalorder %s80, %s81
    %p90 = scmp.eq.s32.totalorder %s23, 0
    %p91 = por %p89, %p90
    %p92 = scmp.ne.s32.totalorder %s80, %s81
    %p93 = scmp.eq.s32.totalorder %s24, 1
    %p94 = por %p92, %p93
    %p96 = scmp.ne.s32.totalorder %s81, %s95
    %p97 = scmp.eq.s32.totalorder %s24, 0
    %p98 = por %p96, %p97
    %s100 = sadd.s32 %s99, 1
    %p103 = scmp.eq.s32.totalorder %s18, 1
    %p104 = scmp.ne.s32.totalorder %s99, %s101
    %p105 = scmp.eq.s32.totalorder %s18, 0
    %p106 = por %p104, %p105
    %p107 = scmp.ne.s32.totalorder %s99, %s101
    %p108 = scmp.eq.s32.totalorder %s23, 1
    %p109 = por %p107, %p108
    %p110 = scmp.ne.s32.totalorder %s101, %s102
    %p111 = scmp.eq.s32.totalorder %s23, 0
    %p112 = por %p110, %p111
    %p113 = scmp.ne.s32.totalorder %s101, %s102
    %p114 = scmp.eq.s32.totalorder %s24, 1
    %p115 = por %p113, %p114
    %p117 = scmp.ne.s32.totalorder %s102, %s116
    %p118 = scmp.eq.s32.totalorder %s24, 0
    %p119 = por %p117, %p118
    %s121 = sadd.s32 %s120, 1
    %p124 = scmp.eq.s32.totalorder %s18, 1
    %p125 = scmp.ne.s32.totalorder %s120, %s122
    %p126 = scmp.eq.s32.totalorder %s18, 0
    %p127 = por %p125, %p126
    %p128 = scmp.ne.s32.totalorder %s120, %s122
    %p129 = scmp.eq.s32.totalorder %s23, 1
    %p130 = por %p128, %p129
    %p131 = scmp.ne.s32.totalorder %s122, %s123
    %p132 = scmp.eq.s32.totalorder %s23, 0
    %p133 = por %p131, %p132
    %p134 = scmp.ne.s32.totalorder %s122, %s123
    %p135 = scmp.eq.s32.totalorder %s24, 1
    %p136 = por %p134, %p135
    %p138 = scmp.ne.s32.totalorder %s123, %s137
    %p139 = scmp.eq.s32.totalorder %s24, 0
    %p140 = por %p138, %p139
    %s142 = sadd.s32 %s141, 1
    %p145 = scmp.eq.s32.totalorder %s18, 1
    %p146 = scmp.ne.s32.totalorder %s141, %s143
    %p147 = scmp.eq.s32.totalorder %s18, 0
    %p148 = por %p146, %p147
    %p149 = scmp.ne.s32.totalorder %s141, %s143
    %p150 = scmp.eq.s32.totalorder %s23, 1
    %p151 = por %p149, %p150
    %p152 = scmp.ne.s32.totalorder %s143, %s144
    %p153 = scmp.eq.s32.totalorder %s23, 0
    %p154 = por %p152, %p153
    %p155 = scmp.ne.s32.totalorder %s143, %s144
    %p156 = scmp.eq.s32.totalorder %s24, 1
    %p157 = por %p155, %p156
    %p159 = scmp.ne.s32.totalorder %s144, %s158
    %p160 = scmp.eq.s32.totalorder %s24, 0
    %p161 = por %p159, %p160
    %s163 = sadd.s32 %s162, 1
    %p166 = scmp.eq.s32.totalorder %s18, 1
    %p167 = scmp.ne.s32.totalorder %s162, %s164
    %p168 = scmp.eq.s32.totalorder %s18, 0
    %p169 = por %p167, %p168
    %p170 = scmp.ne.s32.totalorder %s162, %s164
    %p171 = scmp.eq.s32.totalorder %s23, 1
    %p172 = por %p170, %p171
    %p173 = scmp.ne.s32.totalorder %s164, %s165
    %p174 = scmp.eq.s32.totalorder %s23, 0
    %p175 = por %p173, %p174
    %p176 = scmp.ne.s32.totalorder %s164, %s165
    %p177 = scmp.eq.s32.totalorder %s24, 1
    %p178 = por %p176, %p177
    %p180 = scmp.ne.s32.totalorder %s165, %s179
    %p181 = scmp.eq.s32.totalorder %s24, 0
    %p182 = por %p180, %p181
    %s184 = sadd.s32 %s183, 1
    %p187 = scmp.eq.s32.totalorder %s18, 1
    %p188 = scmp.ne.s32.totalorder %s183, %s185
    %p189 = scmp.eq.s32.totalorder %s18, 0
    %p190 = por %p188, %p189
    %p191 = scmp.ne.s32.totalorder %s183, %s185
    %p192 = scmp.eq.s32.totalorder %s23, 1
    %p193 = por %p191, %p192
    %p194 = scmp.ne.s32.totalorder %s185, %s186
    %p195 = scmp.eq.s32.totalorder %s23, 0
    %p196 = por %p194, %p195
    %p197 = scmp.ne.s32.totalorder %s185, %s186
    %p198 = scmp.eq.s32.totalorder %s24, 1
    %p199 = por %p197, %p198
    %p201 = scmp.ne.s32.totalorder %s186, %s200
    %p202 = scmp.eq.s32.totalorder %s24, 0
    %p203 = por %p201, %p202
    %s205 = sadd.s32 %s204, 1
    %p208 = scmp.eq.s32.totalorder %s18, 1
    %p209 = scmp.ne.s32.totalorder %s204, %s206
    %p210 = scmp.eq.s32.totalorder %s18, 0
    %p211 = por %p209, %p210
    %p212 = scmp.ne.s32.totalorder %s204, %s206
    %p213 = scmp.eq.s32.totalorder %s23, 1
    %p214 = por %p212, %p213
    %p215 = scmp.ne.s32.totalorder %s206, %s207
    %p216 = scmp.eq.s32.totalorder %s23, 0
    %p217 = por %p215, %p216
    %p218 = scmp.ne.s32.totalorder %s206, %s207
    %p219 = scmp.eq.s32.totalorder %s24, 1
    %p220 = por %p218, %p219
    %p222 = scmp.ne.s32.totalorder %s207, %s221
    %p223 = scmp.eq.s32.totalorder %s24, 0
    %p224 = por %p222, %p223
    %s226 = sadd.s32 %s225, 1
    %p229 = scmp.eq.s32.totalorder %s18, 1
    %p230 = scmp.ne.s32.totalorder %s225, %s227
    %p231 = scmp.eq.s32.totalorder %s18, 0
    %p232 = por %p230, %p231
    %p233 = scmp.ne.s32.totalorder %s225, %s227
    %p234 = scmp.eq.s32.totalorder %s23, 1
    %p235 = por %p233, %p234
    %p236 = scmp.ne.s32.totalorder %s227, %s228
    %p237 = scmp.eq.s32.totalorder %s23, 0
    %p238 = por %p236, %p237
    %p239 = scmp.ne.s32.totalorder %s227, %s228
    %p240 = scmp.eq.s32.totalorder %s24, 1
    %p241 = por %p239, %p240
    %p243 = scmp.ne.s32.totalorder %s228, %s242
    %p244 = scmp.eq.s32.totalorder %s24, 0
    %p245 = por %p243, %p244
    %s246 = ssub.s32 %s18, %s25
    %p247 = scmp.eq.s32.totalorder %s246, 0
    %s249 = sadd.s32 %s248, 1
    %s250 = scalar_select %p247, %s248, %s249
    %p253 = pneg %p247
    %p254 = scmp.eq.s32.totalorder %s18, 1
    %p255 = por %p253, %p254
    %p256 = scmp.ne.s32.totalorder %s248, %s251
    %p257 = scmp.eq.s32.totalorder %s18, 0
    %p258 = por %p256, %p257
    %p259 = scmp.ne.s32.totalorder %s248, %s251
    %p260 = scmp.eq.s32.totalorder %s23, 1
    %p261 = por %p259, %p260
    %p262 = scmp.ne.s32.totalorder %s251, %s252
    %p263 = scmp.eq.s32.totalorder %s23, 0
    %p264 = por %p262, %p263
    %p265 = scmp.ne.s32.totalorder %s251, %s252
    %p266 = scmp.eq.s32.totalorder %s24, 1
    %p267 = por %p265, %p266
    %p269 = scmp.ne.s32.totalorder %s252, %s268
    %p270 = scmp.eq.s32.totalorder %s24, 0
    %p271 = por %p269, %p270
    %p272 = scmp.le.s32.totalorder 1, %s18
    %p273 = scmp.lt.s32.totalorder %s18, 3
    %p274 = pnand %p272, %p273
    %p275 = pneg %p274
    // Predicated region
    $region9: #{model_forward.1} parent=5 // pred_check
      _
    $region10: #{model_forward.1} parent=5 // pred_check_branch
      %277 = sbr.rel (%p274) target = $region12
    $region11: #{model_forward.1} parent=5 // pred_region
      %s278 = ssub.s32 %s18, 1
      // Predicated region
      $region13: #{model_forward.1} parent=11 // pred_check
        %p279 = pneg %p91
      $region14: #{model_forward.1} parent=11 // pred_check_branch
        %281 = sbr.rel (%p279) target = $region16
      $region15: #{model_forward.1} parent=11 // pred_region
        _
      $region16: #{model_forward.1} parent=11 // pred_fallthru
        _
      // Predicated region
      $region17: #{model_forward.1} parent=11 // pred_check
        %p282 = pneg %p112
      $region18: #{model_forward.1} parent=11 // pred_check_branch
        %284 = sbr.rel (%p282) target = $region20
      $region19: #{model_forward.1} parent=11 // pred_region
        _
      $region20: #{model_forward.1} parent=11 // pred_fallthru
        _
      // Predicated region
      $region21: #{model_forward.1} parent=11 // pred_check
        %p285 = pneg %p133
      $region22: #{model_forward.1} parent=11 // pred_check_branch
        %287 = sbr.rel (%p285) target = $region24
      $region23: #{model_forward.1} parent=11 // pred_region
        _
      $region24: #{model_forward.1} parent=11 // pred_fallthru
        _
      // Predicated region
      $region25: #{model_forward.1} parent=11 // pred_check
        %p288 = pneg %p154
      $region26: #{model_forward.1} parent=11 // pred_check_branch
        %290 = sbr.rel (%p288) target = $region28
      $region27: #{model_forward.1} parent=11 // pred_region
        _
      $region28: #{model_forward.1} parent=11 // pred_fallthru
        _
      // Predicated region
      $region29: #{model_forward.1} parent=11 // pred_check
        %p291 = pneg %p175
      $region30: #{model_forward.1} parent=11 // pred_check_branch
        %293 = sbr.rel (%p291) target = $region32
      $region31: #{model_forward.1} parent=11 // pred_region
        _
      $region32: #{model_forward.1} parent=11 // pred_fallthru
        _
      // Predicated region
      $region33: #{model_forward.1} parent=11 // pred_check
        %p294 = pneg %p196
      $region34: #{model_forward.1} parent=11 // pred_check_branch
        %296 = sbr.rel (%p294) target = $region36
      $region35: #{model_forward.1} parent=11 // pred_region
        _
      $region36: #{model_forward.1} parent=11 // pred_fallthru
        _
      // Predicated region
      $region37: #{model_forward.1} parent=11 // pred_check
        %p297 = pneg %p217
      $region38: #{model_forward.1} parent=11 // pred_check_branch
        %299 = sbr.rel (%p297) target = $region40
      $region39: #{model_forward.1} parent=11 // pred_region
        _
      $region40: #{model_forward.1} parent=11 // pred_fallthru
        _
      // Predicated region
      $region41: #{model_forward.1} parent=11 // pred_check
        %p300 = pneg %p238
      $region42: #{model_forward.1} parent=11 // pred_check_branch
        %302 = sbr.rel (%p300) target = $region44
      $region43: #{model_forward.1} parent=11 // pred_region
        _
      $region44: #{model_forward.1} parent=11 // pred_fallthru
        _
    $region12: #{model_forward.1} parent=5 // pred_fallthru
      _
    %p303 = scmp.lt.s32.totalorder %s18, 2
    // Predicated region
    $region45: #{model_forward.1} parent=5 // pred_check
      %p304 = pneg %p303
    $region46: #{model_forward.1} parent=5 // pred_check_branch
      %306 = sbr.rel (%p304) target = $region48
    $region47: #{model_forward.1} parent=5 // pred_region
      // Predicated region
      $region49: #{model_forward.1} parent=47 // pred_check
        %p307 = pneg %p38
      $region50: #{model_forward.1} parent=47 // pred_check_branch
        %309 = sbr.rel (%p307) target = $region52
      $region51: #{model_forward.1} parent=47 // pred_region
        %s310 = smul.u32 64, %s18
        %p311 = scmp.lt.s32.totalorder %s310, 127
        %s312 = scalar_select %p311, %s310, 127
        %s313 = smul.addr %s312, 4
        %s314 = scalar_lea.vmem %s0, %s313
        %s315 = smul.u32 64, %s18
      $region52: #{model_forward.1} parent=47 // pred_fallthru
        _
      // Predicated region
      $region53: #{model_forward.1} parent=47 // pred_check
        %p316 = pneg %p64
      $region54: #{model_forward.1} parent=47 // pred_check_branch
        %318 = sbr.rel (%p316) target = $region56
      $region55: #{model_forward.1} parent=47 // pred_region
        %p319 = scmp.lt.s32.totalorder %s18, 1
        %s320 = scalar_select %p319, %s18, 1
        %s321 = scalar_lea.vmem %s1, %s320
      $region56: #{model_forward.1} parent=47 // pred_fallthru
        _
    $region48: #{model_forward.1} parent=5 // pred_fallthru
      _
    %p322 = scmp.le.s32.totalorder 1, %s18
    %p323 = scmp.lt.s32.totalorder %s18, 3
    %p324 = pnand %p322, %p323
    %p325 = pneg %p324
    // Predicated region
    $region57: #{model_forward.1} parent=5 // pred_check
      _
    $region58: #{model_forward.1} parent=5 // pred_check_branch
      %327 = sbr.rel (%p324) target = $region60
    $region59: #{model_forward.1} parent=5 // pred_region
      %s328 = ssub.s32 %s18, 1
      %s329 = smul.u32 64, %s23
      %p330 = scmp.lt.s32.totalorder %s329, 127
      %s331 = scalar_select %p330, %s329, 127
      %s332 = smul.addr %s331, 4
      %s333 = scalar_lea.vmem %s0, %s332
      %p334 = pneg %p44
      %p335 = pneg %p41
      %p336 = scmp.lt.s32.totalorder %s23, 1
      %s337 = scalar_select %p336, %s23, 1
      %s338 = scalar_lea.vmem %s1, %s337
      %p339 = pneg %p70
      %p340 = pneg %p67
      %p341 = pneg %p91
      %p342 = pneg %p88
      %p343 = pneg %p112
      %p344 = pneg %p109
      %p345 = pneg %p133
      %p346 = pneg %p130
      %p347 = pneg %p154
      %p348 = pneg %p151
      %p349 = pneg %p175
      %p350 = pneg %p172
      %p351 = pneg %p196
      %p352 = pneg %p193
      %p353 = pneg %p217
      %p354 = pneg %p214
      %p355 = pneg %p238
      %p356 = pneg %p235
      %p357 = pneg %p264
      %p358 = pneg %p261
      %p359 = scmp.lt.s32.totalorder %s23, 1
      %s360 = scalar_select %p359, %s23, 1
      %s361 = scalar_lea.vmem %s10, %s360
      %s362 = smul.u32 64, %s23
      %p363 = scmp.lt.s32.totalorder %s362, 127
      %s364 = scalar_select %p363, %s362, 127
      %s365 = smul.addr %s364, 4
      %s366 = scalar_lea.vmem %s0, %s365
      %s367 = smul.u32 64, %s23
      %p368 = scmp.lt.s32.totalorder %s23, 1
      %s369 = scalar_select %p368, %s23, 1
      %s370 = scalar_lea.vmem %s1, %s369
      %p371 = scmp.lt.s32.totalorder %s23, 1
      %s372 = scalar_select %p371, %s23, 1
      %s373 = scalar_lea.vmem %s10, %s372
      %v374 = vld [vmem:[%s366] sm:$0xf]
      %v375 = vld [vmem:[%s366 + $0x4] sm:$0xf]
      %v376 = vld [vmem:[%s366 + $0x8] sm:$0xf]
      %v377 = vld [vmem:[%s366 + $0xc] sm:$0xf]
      %v378 = vld [vmem:[%s366 + $0x10] sm:$0xf]
      %v379 = vld [vmem:[%s366 + $0x14] sm:$0xf]
      %v380 = vld [vmem:[%s366 + $0x18] sm:$0xf]
      %v381 = vld [vmem:[%s366 + $0x1c] sm:$0xf]
      %v382 = vld [vmem:[%s366 + $0x20] sm:$0xf]
      %v383 = vld [vmem:[%s366 + $0x24] sm:$0xf]
      %v384 = vld [vmem:[%s366 + $0x28] sm:$0xf]
      %v385 = vld [vmem:[%s366 + $0x2c] sm:$0xf]
      %v386 = vld [vmem:[%s366 + $0x30] sm:$0xf]
      %v387 = vld [vmem:[%s366 + $0x34] sm:$0xf]
      %v388 = vld [vmem:[%s366 + $0x38] sm:$0xf]
      %v389 = vld [vmem:[%s366 + $0x3c] sm:$0xf]
      %v390 = vld [vmem:[%s366 + $0x40] sm:$0xf]
      %v391 = vld [vmem:[%s366 + $0x44] sm:$0xf]
      %v392 = vld [vmem:[%s366 + $0x48] sm:$0xf]
      %v393 = vld [vmem:[%s366 + $0x4c] sm:$0xf]
      %v394 = vld [vmem:[%s366 + $0x50] sm:$0xf]
      %v395 = vld [vmem:[%s366 + $0x54] sm:$0xf]
      %v396 = vld [vmem:[%s366 + $0x58] sm:$0xf]
      %v397 = vld [vmem:[%s366 + $0x5c] sm:$0xf]
      %v398 = vld [vmem:[%s366 + $0x60] sm:$0xf]
      %v399 = vld [vmem:[%s366 + $0x64] sm:$0xf]
      %v400 = vld [vmem:[%s366 + $0x68] sm:$0xf]
      %v401 = vld [vmem:[%s366 + $0x6c] sm:$0xf]
      %v402 = vld [vmem:[%s366 + $0x70] sm:$0xf]
      %v403 = vld [vmem:[%s366 + $0x74] sm:$0xf]
      %v404 = vld [vmem:[%s366 + $0x78] sm:$0xf]
      %v405 = vld [vmem:[%s366 + $0x7c] sm:$0xf]
      %v406 = vld [vmem:[%s366 + $0x80] sm:$0xf]
      %v407 = vld [vmem:[%s366 + $0x84] sm:$0xf]
      %v408 = vld [vmem:[%s366 + $0x88] sm:$0xf]
      %v409 = vld [vmem:[%s366 + $0x8c] sm:$0xf]
      %v410 = vld [vmem:[%s366 + $0x90] sm:$0xf]
      %v411 = vld [vmem:[%s366 + $0x94] sm:$0xf]
      %v412 = vld [vmem:[%s366 + $0x98] sm:$0xf]
      %v413 = vld [vmem:[%s366 + $0x9c] sm:$0xf]
      %v414 = vld [vmem:[%s366 + $0xa0] sm:$0xf]
      %v415 = vld [vmem:[%s366 + $0xa4] sm:$0xf]
      %v416 = vld [vmem:[%s366 + $0xa8] sm:$0xf]
      %v417 = vld [vmem:[%s366 + $0xac] sm:$0xf]
      %v418 = vld [vmem:[%s366 + $0xb0] sm:$0xf]
      %v419 = vld [vmem:[%s366 + $0xb4] sm:$0xf]
      %v420 = vld [vmem:[%s366 + $0xb8] sm:$0xf]
      %v421 = vld [vmem:[%s366 + $0xbc] sm:$0xf]
      %v422 = vld [vmem:[%s366 + $0xc0] sm:$0xf]
      %v423 = vld [vmem:[%s366 + $0xc4] sm:$0xf]
      %v424 = vld [vmem:[%s366 + $0xc8] sm:$0xf]
      %v425 = vld [vmem:[%s366 + $0xcc] sm:$0xf]
      %v426 = vld [vmem:[%s366 + $0xd0] sm:$0xf]
      %v427 = vld [vmem:[%s366 + $0xd4] sm:$0xf]
      %v428 = vld [vmem:[%s366 + $0xd8] sm:$0xf]
      %v429 = vld [vmem:[%s366 + $0xdc] sm:$0xf]
      %v430 = vld [vmem:[%s366 + $0xe0] sm:$0xf]
      %v431 = vld [vmem:[%s366 + $0xe4] sm:$0xf]
      %v432 = vld [vmem:[%s366 + $0xe8] sm:$0xf]
      %v433 = vld [vmem:[%s366 + $0xec] sm:$0xf]
      %v434 = vld [vmem:[%s366 + $0xf0] sm:$0xf]
      %v435 = vld [vmem:[%s366 + $0xf4] sm:$0xf]
      %v436 = vld [vmem:[%s366 + $0xf8] sm:$0xf]
      %v437 = vld [vmem:[%s366 + $0xfc] sm:$0xf]
      %v438 = vld [vmem:[%s2] sm:$0xf]
      %v439 = vld [vmem:[%s2 + $0x4] sm:$0xf]
      %v440 = vld [vmem:[%s2 + $0x8] sm:$0xf]
      %v441 = vld [vmem:[%s2 + $0xc] sm:$0xf]
      %v442 = vld [vmem:[%s2 + $0x10] sm:$0xf]
      %v443 = vld [vmem:[%s2 + $0x14] sm:$0xf]
      %v444 = vld [vmem:[%s2 + $0x18] sm:$0xf]
      %v445 = vld [vmem:[%s2 + $0x1c] sm:$0xf]
      %v446 = vld [vmem:[%s2 + $0x20] sm:$0xf]
      %v447 = vld [vmem:[%s2 + $0x24] sm:$0xf]
      %v448 = vld [vmem:[%s2 + $0x28] sm:$0xf]
      %v449 = vld [vmem:[%s2 + $0x2c] sm:$0xf]
      %v450 = vld [vmem:[%s2 + $0x30] sm:$0xf]
      %v451 = vld [vmem:[%s2 + $0x34] sm:$0xf]
      %v452 = vld [vmem:[%s2 + $0x38] sm:$0xf]
      %v453 = vld [vmem:[%s2 + $0x3c] sm:$0xf]
      %v518 = vunpack.c.l.b16 %v374
      %v519 = vunpack.c.l.b16 %v375
      %v520 = vunpack.c.l.b16 %v376
      %v521 = vunpack.c.l.b16 %v377
      %v522 = vunpack.c.l.b16 %v378
      %v523 = vunpack.c.l.b16 %v379
      %v524 = vunpack.c.l.b16 %v380
      %v525 = vunpack.c.l.b16 %v381
      %v526 = vunpack.c.l.b16 %v382
      %v527 = vunpack.c.l.b16 %v383
      %v528 = vunpack.c.l.b16 %v384
      %v529 = vunpack.c.l.b16 %v385
      %v530 = vunpack.c.l.b16 %v386
      %v531 = vunpack.c.l.b16 %v387
      %v532 = vunpack.c.l.b16 %v388
      %v533 = vunpack.c.l.b16 %v389
      %v534 = vunpack.c.l.b16 %v390
      %v535 = vunpack.c.l.b16 %v391
      %v536 = vunpack.c.l.b16 %v392
      %v537 = vunpack.c.l.b16 %v393
      %v538 = vunpack.c.l.b16 %v394
      %v539 = vunpack.c.l.b16 %v395
      %v540 = vunpack.c.l.b16 %v396
      %v541 = vunpack.c.l.b16 %v397
      %v542 = vunpack.c.l.b16 %v398
      %v543 = vunpack.c.l.b16 %v399
      %v544 = vunpack.c.l.b16 %v400
      %v545 = vunpack.c.l.b16 %v401
      %v546 = vunpack.c.l.b16 %v402
      %v547 = vunpack.c.l.b16 %v403
      %v548 = vunpack.c.l.b16 %v404
      %v549 = vunpack.c.l.b16 %v405
      %v550 = vunpack.c.l.b16 %v406
      %v551 = vunpack.c.l.b16 %v407
      %v552 = vunpack.c.l.b16 %v408
      %v553 = vunpack.c.l.b16 %v409
      %v554 = vunpack.c.l.b16 %v410
      %v555 = vunpack.c.l.b16 %v411
      %v556 = vunpack.c.l.b16 %v412
      %v557 = vunpack.c.l.b16 %v413
      %v558 = vunpack.c.l.b16 %v414
      %v559 = vunpack.c.l.b16 %v415
      %v560 = vunpack.c.l.b16 %v416
      %v561 = vunpack.c.l.b16 %v417
      %v562 = vunpack.c.l.b16 %v418
      %v563 = vunpack.c.l.b16 %v419
      %v564 = vunpack.c.l.b16 %v420
      %v565 = vunpack.c.l.b16 %v421
      %v566 = vunpack.c.l.b16 %v422
      %v567 = vunpack.c.l.b16 %v423
      %v568 = vunpack.c.l.b16 %v424
      %v569 = vunpack.c.l.b16 %v425
      %v570 = vunpack.c.l.b16 %v426
      %v571 = vunpack.c.l.b16 %v427
      %v572 = vunpack.c.l.b16 %v428
      %v573 = vunpack.c.l.b16 %v429
      %v574 = vunpack.c.l.b16 %v430
      %v575 = vunpack.c.l.b16 %v431
      %v576 = vunpack.c.l.b16 %v432
      %v577 = vunpack.c.l.b16 %v433
      %v578 = vunpack.c.l.b16 %v434
      %v579 = vunpack.c.l.b16 %v435
      %v580 = vunpack.c.l.b16 %v436
      %v581 = vunpack.c.l.b16 %v437
      %v582 = vpack.c.b16 %v519, %v518
      %v583 = vpack.c.b16 %v521, %v520
      %v584 = vpack.c.b16 %v523, %v522
      %v585 = vpack.c.b16 %v525, %v524
      %v586 = vpack.c.b16 %v527, %v526
      %v587 = vpack.c.b16 %v529, %v528
      %v588 = vpack.c.b16 %v531, %v530
      %v589 = vpack.c.b16 %v533, %v532
      %v590 = vpack.c.b16 %v535, %v534
      %v591 = vpack.c.b16 %v537, %v536
      %v592 = vpack.c.b16 %v539, %v538
      %v593 = vpack.c.b16 %v541, %v540
      %v594 = vpack.c.b16 %v543, %v542
      %v595 = vpack.c.b16 %v545, %v544
      %v596 = vpack.c.b16 %v547, %v546
      %v597 = vpack.c.b16 %v549, %v548
      %v598 = vpack.c.b16 %v551, %v550
      %v599 = vpack.c.b16 %v553, %v552
      %v600 = vpack.c.b16 %v555, %v554
      %v601 = vpack.c.b16 %v557, %v556
      %v602 = vpack.c.b16 %v559, %v558
      %v603 = vpack.c.b16 %v561, %v560
      %v604 = vpack.c.b16 %v563, %v562
      %v605 = vpack.c.b16 %v565, %v564
      %v606 = vpack.c.b16 %v567, %v566
      %v607 = vpack.c.b16 %v569, %v568
      %v608 = vpack.c.b16 %v571, %v570
      %v609 = vpack.c.b16 %v573, %v572
      %v610 = vpack.c.b16 %v575, %v574
      %v611 = vpack.c.b16 %v577, %v576
      %v612 = vpack.c.b16 %v579, %v578
      %v613 = vpack.c.b16 %v581, %v580
      %v662 = vunpack.c.l.b16 %v438
      %v663 = vunpack.c.l.b16 %v439
      %v664 = vunpack.c.l.b16 %v440
      %v665 = vunpack.c.l.b16 %v441
      %v666 = vunpack.c.l.b16 %v442
      %v667 = vunpack.c.l.b16 %v443
      %v668 = vunpack.c.l.b16 %v444
      %v669 = vunpack.c.l.b16 %v445
      %v670 = vunpack.c.l.b16 %v446
      %v671 = vunpack.c.l.b16 %v447
      %v672 = vunpack.c.l.b16 %v448
      %v673 = vunpack.c.l.b16 %v449
      %v674 = vunpack.c.l.b16 %v450
      %v675 = vunpack.c.l.b16 %v451
      %v676 = vunpack.c.l.b16 %v452
      %v677 = vunpack.c.l.b16 %v453
      %v678 = vpack.c.b16 %v663, %v662
      %v679 = vpack.c.b16 %v665, %v664
      %v680 = vpack.c.b16 %v667, %v666
      %v681 = vpack.c.b16 %v669, %v668
      %v682 = vpack.c.b16 %v671, %v670
      %v683 = vpack.c.b16 %v673, %v672
      %v684 = vpack.c.b16 %v675, %v674
      %v685 = vpack.c.b16 %v677, %v676
      %694 = vmatpush.bf16.msra.mxu0 %v685
      %695 = vmatpush.bf16.msra.mxu0 %v684
      %696 = vmatpush.bf16.msra.mxu0 %v683
      %697 = vmatpush.bf16.msra.mxu0 %v682
      %698 = vmatpush.bf16.msra.mxu0 %v681
      %699 = vmatpush.bf16.msra.mxu0 %v680
      %700 = vmatpush.bf16.msra.mxu0 %v679
      %701 = vmatpush.bf16.msra.mxu0 %v678
      %702 = vmatmul.bf16.gmra.mxu0 %v582
      %v703 = vpop.f32.mrf.mxu0
      %v704 = vadd.f32 0.0, %v703
      %v705 = vpop.f32.mrf.mxu0
      %v706 = vadd.f32 0.0, %v705
      %707 = vmatmul.bf16.gmra.mxu0 %v583
      %v708 = vpop.f32.mrf.mxu0
      %v709 = vadd.f32 0.0, %v708
      %v710 = vpop.f32.mrf.mxu0
      %v711 = vadd.f32 0.0, %v710
      %712 = vmatmul.bf16.gmra.mxu0 %v584
      %v713 = vpop.f32.mrf.mxu0
      %v714 = vadd.f32 0.0, %v713
      %v715 = vpop.f32.mrf.mxu0
      %v716 = vadd.f32 0.0, %v715
      %717 = vmatmul.bf16.gmra.mxu0 %v585
      %v718 = vpop.f32.mrf.mxu0
      %v719 = vadd.f32 0.0, %v718
      %v720 = vpop.f32.mrf.mxu0
      %v721 = vadd.f32 0.0, %v720
      %722 = vmatmul.bf16.gmra.mxu0 %v586
      %v723 = vpop.f32.mrf.mxu0
      %v724 = vadd.f32 0.0, %v723
      %v725 = vpop.f32.mrf.mxu0
      %v726 = vadd.f32 0.0, %v725
      %727 = vmatmul.bf16.gmra.mxu0 %v587
      %v728 = vpop.f32.mrf.mxu0
      %v729 = vadd.f32 0.0, %v728
      %v730 = vpop.f32.mrf.mxu0
      %v731 = vadd.f32 0.0, %v730
      %732 = vmatmul.bf16.gmra.mxu0 %v588
      %v733 = vpop.f32.mrf.mxu0
      %v734 = vadd.f32 0.0, %v733
      %v735 = vpop.f32.mrf.mxu0
      %v736 = vadd.f32 0.0, %v735
      %737 = vmatmul.bf16.gmra.mxu0 %v589
      %v738 = vpop.f32.mrf.mxu0
      %v739 = vadd.f32 0.0, %v738
      %v740 = vpop.f32.mrf.mxu0
      %v741 = vadd.f32 0.0, %v740
      %742 = vmatmul.bf16.gmra.mxu0 %v590
      %v743 = vpop.f32.mrf.mxu0
      %v744 = vadd.f32 0.0, %v743
      %v745 = vpop.f32.mrf.mxu0
      %v746 = vadd.f32 0.0, %v745
      %747 = vmatmul.bf16.gmra.mxu0 %v591
      %v748 = vpop.f32.mrf.mxu0
      %v749 = vadd.f32 0.0, %v748
      %v750 = vpop.f32.mrf.mxu0
      %v751 = vadd.f32 0.0, %v750
      %752 = vmatmul.bf16.gmra.mxu0 %v592
      %v753 = vpop.f32.mrf.mxu0
      %v754 = vadd.f32 0.0, %v753
      %v755 = vpop.f32.mrf.mxu0
      %v756 = vadd.f32 0.0, %v755
      %757 = vmatmul.bf16.gmra.mxu0 %v593
      %v758 = vpop.f32.mrf.mxu0
      %v759 = vadd.f32 0.0, %v758
      %v760 = vpop.f32.mrf.mxu0
      %v761 = vadd.f32 0.0, %v760
      %762 = vmatmul.bf16.gmra.mxu0 %v594
      %v763 = vpop.f32.mrf.mxu0
      %v764 = vadd.f32 0.0, %v763
      %v765 = vpop.f32.mrf.mxu0
      %v766 = vadd.f32 0.0, %v765
      %767 = vmatmul.bf16.gmra.mxu0 %v595
      %v768 = vpop.f32.mrf.mxu0
      %v769 = vadd.f32 0.0, %v768
      %v770 = vpop.f32.mrf.mxu0
      %v771 = vadd.f32 0.0, %v770
      %772 = vmatmul.bf16.gmra.mxu0 %v596
      %v773 = vpop.f32.mrf.mxu0
      %v774 = vadd.f32 0.0, %v773
      %v775 = vpop.f32.mrf.mxu0
      %v776 = vadd.f32 0.0, %v775
      %777 = vmatmul.bf16.gmra.mxu0 %v597
      %v778 = vpop.f32.mrf.mxu0
      %v779 = vadd.f32 0.0, %v778
      %v780 = vpop.f32.mrf.mxu0
      %v781 = vadd.f32 0.0, %v780
      %782 = vmatmul.bf16.gmra.mxu0 %v598
      %v783 = vpop.f32.mrf.mxu0
      %v784 = vadd.f32 0.0, %v783
      %v785 = vpop.f32.mrf.mxu0
      %v786 = vadd.f32 0.0, %v785
      %787 = vmatmul.bf16.gmra.mxu0 %v599
      %v788 = vpop.f32.mrf.mxu0
      %v789 = vadd.f32 0.0, %v788
      %v790 = vpop.f32.mrf.mxu0
      %v791 = vadd.f32 0.0, %v790
      %792 = vmatmul.bf16.gmra.mxu0 %v600
      %v793 = vpop.f32.mrf.mxu0
      %v794 = vadd.f32 0.0, %v793
      %v795 = vpop.f32.mrf.mxu0
      %v796 = vadd.f32 0.0, %v795
      %797 = vmatmul.bf16.gmra.mxu0 %v601
      %v798 = vpop.f32.mrf.mxu0
      %v799 = vadd.f32 0.0, %v798
      %v800 = vpop.f32.mrf.mxu0
      %v801 = vadd.f32 0.0, %v800
      %802 = vmatmul.bf16.gmra.mxu0 %v602
      %v803 = vpop.f32.mrf.mxu0
      %v804 = vadd.f32 0.0, %v803
      %v805 = vpop.f32.mrf.mxu0
      %v806 = vadd.f32 0.0, %v805
      %807 = vmatmul.bf16.gmra.mxu0 %v603
      %v808 = vpop.f32.mrf.mxu0
      %v809 = vadd.f32 0.0, %v808
      %v810 = vpop.f32.mrf.mxu0
      %v811 = vadd.f32 0.0, %v810
      %812 = vmatmul.bf16.gmra.mxu0 %v604
      %v813 = vpop.f32.mrf.mxu0
      %v814 = vadd.f32 0.0, %v813
      %v815 = vpop.f32.mrf.mxu0
      %v816 = vadd.f32 0.0, %v815
      %817 = vmatmul.bf16.gmra.mxu0 %v605
      %v818 = vpop.f32.mrf.mxu0
      %v819 = vadd.f32 0.0, %v818
      %v820 = vpop.f32.mrf.mxu0
      %v821 = vadd.f32 0.0, %v820
      %822 = vmatmul.bf16.gmra.mxu0 %v606
      %v823 = vpop.f32.mrf.mxu0
      %v824 = vadd.f32 0.0, %v823
      %v825 = vpop.f32.mrf.mxu0
      %v826 = vadd.f32 0.0, %v825
      %827 = vmatmul.bf16.gmra.mxu0 %v607
      %v828 = vpop.f32.mrf.mxu0
      %v829 = vadd.f32 0.0, %v828
      %v830 = vpop.f32.mrf.mxu0
      %v831 = vadd.f32 0.0, %v830
      %832 = vmatmul.bf16.gmra.mxu0 %v608
      %v833 = vpop.f32.mrf.mxu0
      %v834 = vadd.f32 0.0, %v833
      %v835 = vpop.f32.mrf.mxu0
      %v836 = vadd.f32 0.0, %v835
      %837 = vmatmul.bf16.gmra.mxu0 %v609
      %v838 = vpop.f32.mrf.mxu0
      %v839 = vadd.f32 0.0, %v838
      %v840 = vpop.f32.mrf.mxu0
      %v841 = vadd.f32 0.0, %v840
      %842 = vmatmul.bf16.gmra.mxu0 %v610
      %v843 = vpop.f32.mrf.mxu0
      %v844 = vadd.f32 0.0, %v843
      %v845 = vpop.f32.mrf.mxu0
      %v846 = vadd.f32 0.0, %v845
      %847 = vmatmul.bf16.gmra.mxu0 %v611
      %v848 = vpop.f32.mrf.mxu0
      %v849 = vadd.f32 0.0, %v848
      %v850 = vpop.f32.mrf.mxu0
      %v851 = vadd.f32 0.0, %v850
      %852 = vmatmul.bf16.gmra.mxu0 %v612
      %v853 = vpop.f32.mrf.mxu0
      %v854 = vadd.f32 0.0, %v853
      %v855 = vpop.f32.mrf.mxu0
      %v856 = vadd.f32 0.0, %v855
      %857 = vmatmul.bf16.gmra.mxu0 %v613
      %v858 = vpop.f32.mrf.mxu0
      %v859 = vadd.f32 0.0, %v858
      %v860 = vpop.f32.mrf.mxu0
      %v861 = vadd.f32 0.0, %v860
      %862 = vdwg.mxu0
      %v863 = vmax.f32 %v704, 0.0
      %v864 = vmax.f32 %v706, 0.0
      %v865 = vmax.f32 %v709, 0.0
      %v866 = vmax.f32 %v711, 0.0
      %v867 = vmax.f32 %v714, 0.0
      %v868 = vmax.f32 %v716, 0.0
      %v869 = vmax.f32 %v719, 0.0
      %v870 = vmax.f32 %v721, 0.0
      %v871 = vmax.f32 %v724, 0.0
      %v872 = vmax.f32 %v726, 0.0
      %v873 = vmax.f32 %v729, 0.0
      %v874 = vmax.f32 %v731, 0.0
      %v875 = vmax.f32 %v734, 0.0
      %v876 = vmax.f32 %v736, 0.0
      %v877 = vmax.f32 %v739, 0.0
      %v878 = vmax.f32 %v741, 0.0
      %v879 = vmax.f32 %v744, 0.0
      %v880 = vmax.f32 %v746, 0.0
      %v881 = vmax.f32 %v749, 0.0
      %v882 = vmax.f32 %v751, 0.0
      %v883 = vmax.f32 %v754, 0.0
      %v884 = vmax.f32 %v756, 0.0
      %v885 = vmax.f32 %v759, 0.0
      %v886 = vmax.f32 %v761, 0.0
      %v887 = vmax.f32 %v764, 0.0
      %v888 = vmax.f32 %v766, 0.0
      %v889 = vmax.f32 %v769, 0.0
      %v890 = vmax.f32 %v771, 0.0
      %v891 = vmax.f32 %v774, 0.0
      %v892 = vmax.f32 %v776, 0.0
      %v893 = vmax.f32 %v779, 0.0
      %v894 = vmax.f32 %v781, 0.0
      %v895 = vmax.f32 %v784, 0.0
      %v896 = vmax.f32 %v786, 0.0
      %v897 = vmax.f32 %v789, 0.0
      %v898 = vmax.f32 %v791, 0.0
      %v899 = vmax.f32 %v794, 0.0
      %v900 = vmax.f32 %v796, 0.0
      %v901 = vmax.f32 %v799, 0.0
      %v902 = vmax.f32 %v801, 0.0
      %v903 = vmax.f32 %v804, 0.0
      %v904 = vmax.f32 %v806, 0.0
      %v905 = vmax.f32 %v809, 0.0
      %v906 = vmax.f32 %v811, 0.0
      %v907 = vmax.f32 %v814, 0.0
      %v908 = vmax.f32 %v816, 0.0
      %v909 = vmax.f32 %v819, 0.0
      %v910 = vmax.f32 %v821, 0.0
      %v911 = vmax.f32 %v824, 0.0
      %v912 = vmax.f32 %v826, 0.0
      %v913 = vmax.f32 %v829, 0.0
      %v914 = vmax.f32 %v831, 0.0
      %v915 = vmax.f32 %v834, 0.0
      %v916 = vmax.f32 %v836, 0.0
      %v917 = vmax.f32 %v839, 0.0
      %v918 = vmax.f32 %v841, 0.0
      %v919 = vmax.f32 %v844, 0.0
      %v920 = vmax.f32 %v846, 0.0
      %v921 = vmax.f32 %v849, 0.0
      %v922 = vmax.f32 %v851, 0.0
      %v923 = vmax.f32 %v854, 0.0
      %v924 = vmax.f32 %v856, 0.0
      %v925 = vmax.f32 %v859, 0.0
      %v926 = vmax.f32 %v861, 0.0
      %v927 = vadd.f32 %v863, %v864
      %v928 = vadd.f32 %v927, %v865
      %v929 = vadd.f32 %v928, %v866
      %v930 = vadd.f32 %v929, %v867
      %v931 = vadd.f32 %v930, %v868
      %v932 = vadd.f32 %v931, %v869
      %v933 = vadd.f32 %v932, %v870
      %v934 = vadd.f32 %v933, %v871
      %v935 = vadd.f32 %v934, %v872
      %v936 = vadd.f32 %v935, %v873
      %v937 = vadd.f32 %v936, %v874
      %v938 = vadd.f32 %v937, %v875
      %v939 = vadd.f32 %v938, %v876
      %v940 = vadd.f32 %v939, %v877
      %v941 = vadd.f32 %v940, %v878
      %v942 = vadd.f32 %v941, %v879
      %v943 = vadd.f32 %v942, %v880
      %v944 = vadd.f32 %v943, %v881
      %v945 = vadd.f32 %v944, %v882
      %v946 = vadd.f32 %v945, %v883
      %v947 = vadd.f32 %v946, %v884
      %v948 = vadd.f32 %v947, %v885
      %v949 = vadd.f32 %v948, %v886
      %v950 = vadd.f32 %v949, %v887
      %v951 = vadd.f32 %v950, %v888
      %v952 = vadd.f32 %v951, %v889
      %v953 = vadd.f32 %v952, %v890
      %v954 = vadd.f32 %v953, %v891
      %v955 = vadd.f32 %v954, %v892
      %v956 = vadd.f32 %v955, %v893
      %v957 = vadd.f32 %v956, %v894
      %v958 = vrot.slane %v957, 4
      %v959 = vadd.f32 %v957, %v958
      %v960 = vrot.slane %v959, 2
      %v961 = vadd.f32 %v959, %v960
      %v962 = vrot.slane %v961, 1
      %v963 = vadd.f32 %v961, %v962
      %v964 = vadd.f32 %v895, %v896
      %v965 = vadd.f32 %v964, %v897
      %v966 = vadd.f32 %v965, %v898
      %v967 = vadd.f32 %v966, %v899
      %v968 = vadd.f32 %v967, %v900
      %v969 = vadd.f32 %v968, %v901
      %v970 = vadd.f32 %v969, %v902
      %v971 = vadd.f32 %v970, %v903
      %v972 = vadd.f32 %v971, %v904
      %v973 = vadd.f32 %v972, %v905
      %v974 = vadd.f32 %v973, %v906
      %v975 = vadd.f32 %v974, %v907
      %v976 = vadd.f32 %v975, %v908
      %v977 = vadd.f32 %v976, %v909
      %v978 = vadd.f32 %v977, %v910
      %v979 = vadd.f32 %v978, %v911
      %v980 = vadd.f32 %v979, %v912
      %v981 = vadd.f32 %v980, %v913
      %v982 = vadd.f32 %v981, %v914
      %v983 = vadd.f32 %v982, %v915
      %v984 = vadd.f32 %v983, %v916
      %v985 = vadd.f32 %v984, %v917
      %v986 = vadd.f32 %v985, %v918
      %v987 = vadd.f32 %v986, %v919
      %v988 = vadd.f32 %v987, %v920
      %v989 = vadd.f32 %v988, %v921
      %v990 = vadd.f32 %v989, %v922
      %v991 = vadd.f32 %v990, %v923
      %v992 = vadd.f32 %v991, %v924
      %v993 = vadd.f32 %v992, %v925
      %v994 = vadd.f32 %v993, %v926
      %v995 = vrot.slane %v994, 4
      %v996 = vadd.f32 %v994, %v995
      %v997 = vrot.slane %v996, 2
      %v998 = vadd.f32 %v996, %v997
      %v999 = vrot.slane %v998, 1
      %v1000 = vadd.f32 %v998, %v999
      %v1001 = vmul.f32 %v963, 0.00390625
      %v1002 = vmul.f32 %v1000, 0.00390625
      %v1003 = vld [vmem:[%s370] sm:$0x1]
      %v1004 = vld [vmem:[%s3] sm:$0xf]
      %v1005 = vld [vmem:[%s3 + $0x4] sm:$0xf]
      %v1006 = vld [vmem:[%s3 + $0x8] sm:$0xf]
      %v1007 = vld [vmem:[%s3 + $0xc] sm:$0xf]
      %v1008 = vld [vmem:[%s3 + $0x10] sm:$0xf]
      %v1009 = vld [vmem:[%s3 + $0x14] sm:$0xf]
      %v1010 = vld [vmem:[%s3 + $0x18] sm:$0xf]
      %v1011 = vld [vmem:[%s3 + $0x1c] sm:$0xf]
      %v1012 = vld [vmem:[%s3 + $0x20] sm:$0xf]
      %v1013 = vld [vmem:[%s3 + $0x24] sm:$0xf]
      %v1014 = vld [vmem:[%s3 + $0x28] sm:$0xf]
      %v1015 = vld [vmem:[%s3 + $0x2c] sm:$0xf]
      %v1016 = vld [vmem:[%s3 + $0x30] sm:$0xf]
      %v1017 = vld [vmem:[%s3 + $0x34] sm:$0xf]
      %v1018 = vld [vmem:[%s3 + $0x38] sm:$0xf]
      %v1019 = vld [vmem:[%s3 + $0x3c] sm:$0xf]
      %v1020 = vld [vmem:[%s4] sm:$0x1]
      %v1037 = vunpack.c.l.b16 %v1004
      %v1038 = vunpack.c.l.b16 %v1005
      %v1039 = vunpack.c.l.b16 %v1006
      %v1040 = vunpack.c.l.b16 %v1007
      %v1041 = vunpack.c.l.b16 %v1008
      %v1042 = vunpack.c.l.b16 %v1009
      %v1043 = vunpack.c.l.b16 %v1010
      %v1044 = vunpack.c.l.b16 %v1011
      %v1045 = vunpack.c.l.b16 %v1012
      %v1046 = vunpack.c.l.b16 %v1013
      %v1047 = vunpack.c.l.b16 %v1014
      %v1048 = vunpack.c.l.b16 %v1015
      %v1049 = vunpack.c.l.b16 %v1016
      %v1050 = vunpack.c.l.b16 %v1017
      %v1051 = vunpack.c.l.b16 %v1018
      %v1052 = vunpack.c.l.b16 %v1019
      %v1053 = vpack.c.b16 %v1038, %v1037
      %v1054 = vpack.c.b16 %v1040, %v1039
      %v1055 = vpack.c.b16 %v1042, %v1041
      %v1056 = vpack.c.b16 %v1044, %v1043
      %v1057 = vpack.c.b16 %v1046, %v1045
      %v1058 = vpack.c.b16 %v1048, %v1047
      %v1059 = vpack.c.b16 %v1050, %v1049
      %v1060 = vpack.c.b16 %v1052, %v1051
      %1069 = vmatpush.bf16.msra.mxu0 %v1060
      %1070 = vmatpush.bf16.msra.mxu0 %v1059
      %1071 = vmatpush.bf16.msra.mxu0 %v1058
      %1072 = vmatpush.bf16.msra.mxu0 %v1057
      %1073 = vmatpush.bf16.msra.mxu0 %v1056
      %1074 = vmatpush.bf16.msra.mxu0 %v1055
      %1075 = vmatpush.bf16.msra.mxu0 %v1054
      %1076 = vmatpush.bf16.msra.mxu0 %v1053
      %1077 = vmatmul.bf16.gmra.mxu0 %v1003
      %v1078 = vpop.f32.mrf.mxu0
      %v1079 = vadd.f32 %v1020, %v1078
      %v1080 = vpop.f32.mrf.mxu0
      %1081 = vdwg.mxu0
      %vm1082 = vcmask 516096
      %v1083 = vsel %vm1082, %v1079, 0.0
      %1084 = vadd.xlane.f32.xlu0 %v1083
      %v1085 = vpop.xlane.xlu0 %1084
      %v1086 = vrcp.pop 64.0
      %v1087 = vmul.f32 64.0, %v1086
      %v1088 = vsub.f32 1.0, %v1087
      %v1089 = vmul.f32 %v1086, %v1088
      %v1090 = vadd.f32 %v1086, %v1089
      %vm1091 = vweird.f32 %v1086
      %v1092 = vsel %vm1091, %v1086, %v1090
      %v1093 = vmul.f32 %v1085, %v1092
      %v1094 = vsub.f32 %v1079, %v1093
      %v1095 = vmul.f32 %v1094, %v1094
      %v1096 = vsel %vm1082, %v1095, 0.0
      %1097 = vadd.xlane.f32.xlu0 %v1096
      %v1098 = vpop.xlane.xlu0 %1097
      %v1099 = vmul.f32 %v1098, %v1092
      %v1100 = vadd.f32 %v1099, 1e-05
      %v1101 = vrsqrt.pop %v1100
      %v1102 = vmul.f32 %v1101, %v1100
      %v1103 = vmul.f32 %v1102, %v1101
      %v1104 = vmul.f32 0.5, %v1103
      %v1105 = vsub.f32 1.5, %v1104
      %v1106 = vmul.f32 %v1101, %v1105
      %vm1107 = vweird.f32 %v1100
      %vm1108 = vweird.f32 %v1101
      %vm1109 = vmor %vm1107, %vm1108
      %v1110 = vsel %vm1109, %v1101, %v1106
      %v1111 = vmul.f32 %v1094, %v1110
      %v1112 = vld [vmem:[%s5] sm:$0x1]
      %v1113 = vmul.f32 %v1111, %v1112
      %v1114 = vld [vmem:[%s6] sm:$0x1]
      %v1115 = vadd.f32 %v1113, %v1114
      %v1116 = vmax.f32 %v1115, 0.0
      %v1117 = vld [vmem:[%s7] sm:$0x3]
      %v1119 = vrot.slane %v1117, 1
      %v1122 = vmul.f32 %v1001, %v1117
      %v1123 = vmul.f32 %v1002, %v1119
      %v1126 = vrot.slane %v1123, 7
      %vm1127 = vcmask 1041409
      %v1128 = vsel %vm1127, %v1126, %v1122
      %vm1130 = vcmask 1041408
      %v1131 = vsel %vm1130, %v1128, 0.0
      %v1132 = vrot.slane %v1131, 4
      %v1133 = vadd.f32 %v1131, %v1132
      %v1134 = vrot.slane %v1133, 2
      %v1135 = vadd.f32 %v1133, %v1134
      %v1136 = vrot.slane %v1135, 1
      %v1137 = vadd.f32 %v1135, %v1136
      %vm1138 = vcmask 1040384
      %v1139 = vsel %vm1138, %v1137, 0.0
      %1140 = vadd.xlane.f32.xlu0 %v1139
      %v1141 = vpop.xlane.xlu0 %1140
      %v1142 = vld [vmem:[%s8] sm:$0x1]
      %v1143 = vmul.f32 %v1116, %v1142
      %v1144 = vsel %vm1082, %v1143, 0.0
      %1145 = vadd.xlane.f32.xlu0 %v1144
      %v1146 = vpop.xlane.xlu0 %1145
      %v1147 = vadd.f32 %v1141, %v1146
      %v1148 = vld [vmem:[#allocation2] sm:$0x1]
      %v1149 = vadd.f32 %v1147, %v1148
      %1151 = vset.pattern.permute.xlu0 0
      %1152 = vperm.xlu0 %1151, %v1149
      %v1153 = vpop.permute.xlu0 %1152
      %1155 = vst [vmem:[%s373] sm:$0x1] %v1153
      %p1156 = scmp.lt.s32.totalorder %s23, 1
      %s1157 = scalar_select %p1156, %s23, 1
      %s1158 = scalar_lea.vmem %s10, %s1157
      // Predicated region
      $region61: #{model_forward.1} parent=59 // pred_check
        %p1159 = pneg %p261
      $region62: #{model_forward.1} parent=59 // pred_check_branch
        %1161 = sbr.rel (%p1159) target = $region64
      $region63: #{model_forward.1} parent=59 // pred_region
        _
      $region64: #{model_forward.1} parent=59 // pred_fallthru
        _
    $region60: #{model_forward.1} parent=5 // pred_fallthru
      _
    %p1162 = scmp.le.s32.totalorder 2, %s18
    // Predicated region
    $region65: #{model_forward.1} parent=5 // pred_check
      %p1163 = pneg %p1162
    $region66: #{model_forward.1} parent=5 // pred_check_branch
      %1165 = sbr.rel (%p1163) target = $region68
    $region67: #{model_forward.1} parent=5 // pred_region
      %s1166 = ssub.s32 %s18, 2
      // Predicated region
      $region69: #{model_forward.1} parent=67 // pred_check
        %p1167 = pneg %p267
      $region70: #{model_forward.1} parent=67 // pred_check_branch
        %1169 = sbr.rel (%p1167) target = $region72
      $region71: #{model_forward.1} parent=67 // pred_region
        %p1170 = scmp.lt.s32.totalorder %s24, 1
        %s1171 = scalar_select %p1170, %s24, 1
        %s1172 = scalar_lea.vmem %s10, %s1171
      $region72: #{model_forward.1} parent=67 // pred_fallthru
        _
    $region68: #{model_forward.1} parent=5 // pred_fallthru
      _
  $region6: #{model_forward.1} parent=0 // loop_footer
    %s22 = sadd.s32 1, %s18
  $region7: #{model_forward.1} parent=0 // loop_footer_branch
    %17 = sbr.rel target = $region3
  $region8: #{model_forward.1} parent=0 // loop_exit
    _

</llo_original>
